<compile_context>
chip_gen: v6e
topology: v6e:2x2x1
jax: 0.10.0
libtpu: 0.0.40
codegen_flags: <defaults>
</compile_context>

<pallas_src>
import functools

import jax
import jax.numpy as jnp
from jax.experimental import pallas as pl
from jax.experimental.pallas import tpu as pltpu

EPS = 1e-5  # PyTorch nn.LayerNorm default


# --------------------------------------------------------------------------- #
# Kernel                                                                      #
# --------------------------------------------------------------------------- #
def adanorm_kernel(h_ref, a_ref, ws_ref, wsh_ref, bs_ref, bsh_ref, o_ref):
    # LayerNorm over the last axis (no elementwise affine); math in f32.
    # Two-pass (centered) variance kept for numerical stability.
    h = h_ref[...].astype(jnp.float32)
    mean = jnp.mean(h, axis=-1, keepdims=True)
    centered = h - mean
    var = jnp.mean(centered * centered, axis=-1, keepdims=True)
    normed = centered * jax.lax.rsqrt(var + EPS)

    # Adaptive scale / shift: two (TM, ada_dim) x (ada_dim, in_dim) MXU matmuls
    # feeding straight into the multiply/add -- no (TM, 2*in_dim) slab, no slices.
    # Cast ada to the weight dtype so bf16 weights actually run a bf16 matmul.
    a = a_ref[...].astype(ws_ref.dtype)
    scale = jnp.dot(a, ws_ref[...], preferred_element_type=jnp.float32) + bs_ref[...]
    shift = jnp.dot(a, wsh_ref[...], preferred_element_type=jnp.float32) + bsh_ref[...]

    # bs_ref already has the "+1" of (1 + scale) folded in.
    o_ref[...] = (normed * scale + shift).astype(o_ref.dtype)


# --------------------------------------------------------------------------- #
# One-time parameter preparation (off the hot path)                           #
# --------------------------------------------------------------------------- #
def prepare_ada_params(w, b, in_dim, param_dtype=None):
    """Convert PyTorch nn.Linear(ada_dim, 2*in_dim) params to the kernel layout.

    w: (2*in_dim, ada_dim) -> w_scale, w_shift: (ada_dim, in_dim) each
    b: (2*in_dim,)         -> b_scale (+1 folded in), b_shift: (1, in_dim) f32
    param_dtype (e.g. jnp.bfloat16) halves the resident-weight VMEM / HBM traffic
    on v6e/v7x; accumulation stays f32 inside the kernel.
    """
    assert w.shape[0] == 2 * in_dim and b.shape == (2 * in_dim,)
    w_scale = jnp.transpose(w[:in_dim])      # (ada_dim, in_dim)
    w_shift = jnp.transpose(w[in_dim:])      # (ada_dim, in_dim)
    b_scale = (b[:in_dim] + 1.0).reshape(1, in_dim).astype(jnp.float32)
    b_shift = b[in_dim:].reshape(1, in_dim).astype(jnp.float32)
    if param_dtype is not None:
        w_scale = w_scale.astype(param_dtype)
        w_shift = w_shift.astype(param_dtype)
    return w_scale, w_shift, b_scale, b_shift


# --------------------------------------------------------------------------- #
# Wrapper                                                                     #
# --------------------------------------------------------------------------- #
def _round_up(x, m):
    return ((x + m - 1) // m) * m


def _row_align(dtype):
    # sub-32-bit dtypes pack rows along sublanes: 16 rows for 2-byte, 32 for 1-byte
    return {4: 8, 2: 16, 1: 32}.get(jnp.dtype(dtype).itemsize, 8)


def _vmem_bytes_estimate(tm, in_dim, ada_dim, h_dt, a_dt, w_dt, o_dt):
    bpe = lambda dt: jnp.dtype(dt).itemsize
    dbuf = 2 * tm * in_dim * bpe(h_dt)          # hidden tiles, double-buffered
    dbuf += 2 * tm * in_dim * bpe(o_dt)         # output tiles, double-buffered
    dbuf += 2 * tm * ada_dim * bpe(a_dt)        # ada tiles, double-buffered
    resident = 2 * ada_dim * in_dim * bpe(w_dt)  # W halves, Buffered(1)
    resident += 2 * in_dim * 4                   # fused f32 biases
    temps = 5 * tm * in_dim * 4                  # f32 LN + scale/shift live temps (upper bound)
    return dbuf + resident + temps


@functools.partial(jax.jit, static_argnames=("tm", "vmem_limit"))
def _adanorm_call(hidden_states, ada_embed, w_scale, w_shift, b_scale, b_shift,
                  *, tm, vmem_limit):
    B, in_dim = hidden_states.shape
    _, ada_dim = ada_embed.shape
    grid = pl.cdiv(B, tm)  # ragged B handled by Pallas boundary-tile masking
    return pl.pallas_call(
        adanorm_kernel,
        out_shape=jax.ShapeDtypeStruct((B, in_dim), hidden_states.dtype),
        grid_spec=pltpu.PrefetchScalarGridSpec(
            num_scalar_prefetch=0,
            grid=(grid,),
            in_specs=[
                pl.BlockSpec((tm, in_dim), lambda i: (i, 0)),        # hidden tile
                pl.BlockSpec((tm, ada_dim), lambda i: (i, 0)),       # ada tile
                pl.BlockSpec((ada_dim, in_dim), lambda i: (0, 0),    # resident W (scale)
                             pipeline_mode=pl.Buffered(1)),
                pl.BlockSpec((ada_dim, in_dim), lambda i: (0, 0),    # resident W (shift)
                             pipeline_mode=pl.Buffered(1)),
                pl.BlockSpec((1, in_dim), lambda i: (0, 0),          # resident bias (+1 folded)
                             pipeline_mode=pl.Buffered(1)),
                pl.BlockSpec((1, in_dim), lambda i: (0, 0),          # resident bias (shift)
                             pipeline_mode=pl.Buffered(1)),
            ],
            out_specs=pl.BlockSpec((tm, in_dim), lambda i: (i, 0)),
        ),
        compiler_params=pltpu.CompilerParams(
            dimension_semantics=("parallel",),   # dual-TC sharding on v7x; harmless elsewhere
            vmem_limit_bytes=vmem_limit,
        ),
    )(hidden_states, ada_embed, w_scale, w_shift, b_scale, b_shift)


def adanorm(hidden_states, ada_embed, w_scale, w_shift, b_scale, b_shift, *, tm=512):
    """hidden_states: (B, in_dim); ada_embed: (B, ada_dim);
    w_scale/w_shift: (ada_dim, in_dim); b_scale/b_shift: (1, in_dim)."""
    B, in_dim = hidden_states.shape
    Ba, ada_dim = ada_embed.shape
    assert B == Ba
    assert w_scale.shape == (ada_dim, in_dim) and w_shift.shape == (ada_dim, in_dim)
    assert b_scale.shape == (1, in_dim) and b_shift.shape == (1, in_dim)
    assert in_dim % 128 == 0, "feature axis must be lane-aligned (pad params/inputs once in caller)"
    # TODO(synk): ada_dim may be ragged (<128); if the projection matmul ever
    # dominates, pad W rows / ada columns to 128 once off the hot path.

    align = max(_row_align(hidden_states.dtype), _row_align(ada_embed.dtype))

    # --- pick the batch tile (sublane-aligned for the activation dtype) ---
    tm = max(align, (int(tm) // align) * align)
    tm = min(tm, _round_up(B, align))
    if B > align and pl.cdiv(B, tm) < 2:
        # keep >= 2 grid steps so both v7x TensorCores get work on small batches
        tm = max(align, _round_up(pl.cdiv(B, 2), align))

    # --- VMEM budget computed from actual buffer sizes (not hard-coded) ---
    try:
        phys_vmem = int(pltpu.get_tpu_info().vmem_capacity_bytes)
    except Exception:
        phys_vmem = 64 * 1024 * 1024  # assume tightest budget (v7x per-TC)
    budget = int(phys_vmem * 0.9)

    def est(t):
        return _vmem_bytes_estimate(t, in_dim, ada_dim, hidden_states.dtype,
                                    ada_embed.dtype, w_scale.dtype,
                                    hidden_states.dtype)

    while tm > align and est(tm) > budget:
        tm = max(align, ((tm // 2) // align) * align)
    vmem_limit = int(min(budget, max(est(tm) + (2 << 20), 16 << 20)))

    return _adanorm_call(hidden_states, ada_embed, w_scale, w_shift, b_scale, b_shift,
                         tm=tm, vmem_limit=vmem_limit)


# --------------------------------------------------------------------------- #
# Pure-JAX reference (mirrors the PyTorch module, unfused layout)             #
# --------------------------------------------------------------------------- #
def adanorm_ref(hidden_states, ada_embed, w, b):
    h = hidden_states.astype(jnp.float32)
    mean = jnp.mean(h, axis=-1, keepdims=True)
    var = jnp.mean((h - mean) ** 2, axis=-1, keepdims=True)
    normed = (h - mean) / jnp.sqrt(var + EPS)
    proj = ada_embed.astype(jnp.float32) @ w.T.astype(jnp.float32) + b.astype(jnp.float32)
    in_dim = hidden_states.shape[-1]
    scale, shift = proj[:, :in_dim], proj[:, in_dim:]
    return (normed * (1.0 + scale) + shift).astype(hidden_states.dtype)


if __name__ == "__main__":
    in_dim, ada_dim = 128, 64

    key = jax.random.PRNGKey(0)
    k_h, k_a, k_w, k_b, k_h2, k_a2 = jax.random.split(key, 6)

    # Deterministic synthetic parameters for nn.Linear(ada_dim, 2*in_dim).
    bound = 1.0 / (ada_dim ** 0.5)
    w = jax.random.uniform(k_w, (2 * in_dim, ada_dim), jnp.float32, -bound, bound)
    b = jax.random.uniform(k_b, (2 * in_dim,), jnp.float32, -bound, bound)

    params_f32 = prepare_ada_params(w, b, in_dim)

    # --- Case 1: f32, batch divisible by the tile (grid of 2 steps) ---
    B = 16
    hidden_states = jax.random.normal(k_h, (B, in_dim), dtype=jnp.float32)
    ada_embed = jax.random.normal(k_a, (B, ada_dim), dtype=jnp.float32)
    out = jax.block_until_ready(adanorm(hidden_states, ada_embed, *params_f32))
    ref = adanorm_ref(hidden_states, ada_embed, w, b)
    assert out.shape == (B, in_dim)
    assert jnp.allclose(out, ref, atol=1e-4, rtol=1e-4), "f32 mismatch vs reference"

    # --- Case 2: ragged batch (boundary tile masked by Pallas, no wrapper pad) ---
    B2 = 13
    h2 = jax.random.normal(k_h2, (B2, in_dim), dtype=jnp.float32)
    a2 = jax.random.normal(k_a2, (B2, ada_dim), dtype=jnp.float32)
    out2 = jax.block_until_ready(adanorm(h2, a2, *params_f32))
    ref2 = adanorm_ref(h2, a2, w, b)
    assert out2.shape == (B2, in_dim)
    assert jnp.allclose(out2, ref2, atol=1e-4, rtol=1e-4), "ragged-B mismatch vs reference"

    # --- Case 3: bf16 projection weights (v6e/v7x fast path; LN stays f32) ---
    params_bf16 = prepare_ada_params(w, b, in_dim, param_dtype=jnp.bfloat16)
    out3 = jax.block_until_ready(adanorm(hidden_states, ada_embed, *params_bf16))
    assert jnp.allclose(out3, ref, atol=5e-2, rtol=5e-2), "bf16-weight mismatch vs reference"

    print("KERNEL_OK")
</pallas_src>

<mosaic_0001>
module attributes {stable_mosaic.version = 11 : i64} {
  func.func @adanorm_kernel(%arg0: i32, %arg1: memref<8x128xf32, #tpu.memory_space<vmem>>, %arg2: memref<8x64xf32, #tpu.memory_space<vmem>>, %arg3: memref<64x128xf32, #tpu.memory_space<vmem>>, %arg4: memref<64x128xf32, #tpu.memory_space<vmem>>, %arg5: memref<1x128xf32, #tpu.memory_space<vmem>>, %arg6: memref<1x128xf32, #tpu.memory_space<vmem>>, %arg7: memref<8x128xf32, #tpu.memory_space<vmem>>) attributes {dimension_semantics = [#tpu.dimension_semantics<parallel>], iteration_bounds = array<i64: 2>, scalar_prefetch = 0 : i64, scratch_operands = 0 : i64, tpu.core_type = #tpu.core_type<tc>, window_params = [{transform_indices = @transform_0, window_bounds = array<i64: 8, 128>}, {transform_indices = @transform_1, window_bounds = array<i64: 8, 64>}, {pipeline_mode = #tpu.pipeline_mode<synchronous>, transform_indices = @transform_2, window_bounds = array<i64: 64, 128>}, {pipeline_mode = #tpu.pipeline_mode<synchronous>, transform_indices = @transform_3, window_bounds = array<i64: 64, 128>}, {pipeline_mode = #tpu.pipeline_mode<synchronous>, transform_indices = @transform_4, window_bounds = array<i64: 1, 128>}, {pipeline_mode = #tpu.pipeline_mode<synchronous>, transform_indices = @transform_5, window_bounds = array<i64: 1, 128>}, {transform_indices = @transform_6, window_bounds = array<i64: 8, 128>}]} {
    %c0 = arith.constant 0 : index
    %c0_0 = arith.constant 0 : index
    %0 = vector.load %arg1[%c0, %c0_0] : memref<8x128xf32, #tpu.memory_space<vmem>>, vector<8x128xf32>
    %cst = arith.constant dense<0.000000e+00> : vector<8xf32>
    %1 = vector.multi_reduction <add>, %0, %cst [1] : vector<8x128xf32> to vector<8xf32>
    %2 = vector.shape_cast %1 : vector<8xf32> to vector<8x1xf32>
    %cst_1 = arith.constant 1.280000e+02 : f32
    %3 = vector.broadcast %cst_1 : f32 to vector<8x1xf32>
    %4 = arith.divf %2, %3 : vector<8x1xf32>
    %5 = vector.broadcast %4 : vector<8x1xf32> to vector<8x128xf32>
    %6 = arith.subf %0, %5 : vector<8x128xf32>
    %7 = arith.mulf %6, %6 : vector<8x128xf32>
    %cst_2 = arith.constant dense<0.000000e+00> : vector<8xf32>
    %8 = vector.multi_reduction <add>, %7, %cst_2 [1] : vector<8x128xf32> to vector<8xf32>
    %9 = vector.shape_cast %8 : vector<8xf32> to vector<8x1xf32>
    %cst_3 = arith.constant 1.280000e+02 : f32
    %10 = vector.broadcast %cst_3 : f32 to vector<8x1xf32>
    %11 = arith.divf %9, %10 : vector<8x1xf32>
    %cst_4 = arith.constant 9.99999974E-6 : f32
    %12 = vector.broadcast %cst_4 : f32 to vector<8x1xf32>
    %13 = arith.addf %11, %12 : vector<8x1xf32>
    %14 = math.rsqrt %13 : vector<8x1xf32>
    %15 = vector.broadcast %14 : vector<8x1xf32> to vector<8x128xf32>
    %16 = arith.mulf %6, %15 : vector<8x128xf32>
    %c0_5 = arith.constant 0 : index
    %c0_6 = arith.constant 0 : index
    %17 = vector.load %arg2[%c0_5, %c0_6] : memref<8x64xf32, #tpu.memory_space<vmem>>, vector<8x64xf32>
    %c0_7 = arith.constant 0 : index
    %c0_8 = arith.constant 0 : index
    %18 = vector.load %arg3[%c0_7, %c0_8] : memref<64x128xf32, #tpu.memory_space<vmem>>, vector<64x128xf32>
    %cst_9 = arith.constant dense<0.000000e+00> : vector<8x128xf32>
    %19 = tpu.matmul %17, %18, %cst_9 {dimension_numbers = #tpu.dot_dimension_numbers<[1], [0], [0], [1], [0, 0, 1, 1], [], []>} : vector<8x64xf32>, vector<64x128xf32>, vector<8x128xf32> -> vector<8x128xf32>
    %c0_10 = arith.constant 0 : index
    %c0_11 = arith.constant 0 : index
    %20 = vector.load %arg5[%c0_10, %c0_11] : memref<1x128xf32, #tpu.memory_space<vmem>>, vector<1x128xf32>
    %21 = vector.broadcast %20 : vector<1x128xf32> to vector<8x128xf32>
    %22 = arith.addf %19, %21 : vector<8x128xf32>
    %c0_12 = arith.constant 0 : index
    %c0_13 = arith.constant 0 : index
    %23 = vector.load %arg4[%c0_12, %c0_13] : memref<64x128xf32, #tpu.memory_space<vmem>>, vector<64x128xf32>
    %cst_14 = arith.constant dense<0.000000e+00> : vector<8x128xf32>
    %24 = tpu.matmul %17, %23, %cst_14 {dimension_numbers = #tpu.dot_dimension_numbers<[1], [0], [0], [1], [0, 0, 1, 1], [], []>} : vector<8x64xf32>, vector<64x128xf32>, vector<8x128xf32> -> vector<8x128xf32>
    %c0_15 = arith.constant 0 : index
    %c0_16 = arith.constant 0 : index
    %25 = vector.load %arg6[%c0_15, %c0_16] : memref<1x128xf32, #tpu.memory_space<vmem>>, vector<1x128xf32>
    %26 = vector.broadcast %25 : vector<1x128xf32> to vector<8x128xf32>
    %27 = arith.addf %24, %26 : vector<8x128xf32>
    %28 = arith.mulf %16, %22 : vector<8x128xf32>
    %29 = arith.addf %28, %27 : vector<8x128xf32>
    %c0_17 = arith.constant 0 : index
    %c0_18 = arith.constant 0 : index
    %30 = vector.load %arg7[%c0_17, %c0_18] : memref<8x128xf32, #tpu.memory_space<vmem>>, vector<8x128xf32>
    tpu.vector_store %arg7[%c0_17, %c0_18], %29 {strides = array<i32>} : memref<8x128xf32, #tpu.memory_space<vmem>>, vector<8x128xf32>,
    return
  }
  func.func @transform_0(%arg0: i32) -> (i32, i32) {
    %c0_i32 = arith.constant 0 : i32
    %c0_i32_0 = arith.constant 0 : i32
    return %arg0, %c0_i32 : i32, i32
  }
  func.func @transform_1(%arg0: i32) -> (i32, i32) {
    %c0_i32 = arith.constant 0 : i32
    %c0_i32_0 = arith.constant 0 : i32
    return %arg0, %c0_i32 : i32, i32
  }
  func.func @transform_2(%arg0: i32) -> (i32, i32) {
    %c0_i32 = arith.constant 0 : i32
    %c0_i32_0 = arith.constant 0 : i32
    %c0_i32_1 = arith.constant 0 : i32
    return %c0_i32, %c0_i32_0 : i32, i32
  }
  func.func @transform_3(%arg0: i32) -> (i32, i32) {
    %c0_i32 = arith.constant 0 : i32
    %c0_i32_0 = arith.constant 0 : i32
    %c0_i32_1 = arith.constant 0 : i32
    return %c0_i32, %c0_i32_0 : i32, i32
  }
  func.func @transform_4(%arg0: i32) -> (i32, i32) {
    %c0_i32 = arith.constant 0 : i32
    %c0_i32_0 = arith.constant 0 : i32
    %c0_i32_1 = arith.constant 0 : i32
    return %c0_i32, %c0_i32_0 : i32, i32
  }
  func.func @transform_5(%arg0: i32) -> (i32, i32) {
    %c0_i32 = arith.constant 0 : i32
    %c0_i32_0 = arith.constant 0 : i32
    %c0_i32_1 = arith.constant 0 : i32
    return %c0_i32, %c0_i32_0 : i32, i32
  }
  func.func @transform_6(%arg0: i32) -> (i32, i32) {
    %c0_i32 = arith.constant 0 : i32
    %c0_i32_0 = arith.constant 0 : i32
    return %arg0, %c0_i32 : i32, i32
  }
}

</mosaic_0001>

<llo_original>
// kernel: _adanorm_call.1
$region0: #{_adanorm_call.1}
  #allocation0 [shape = 'u32[]', space=smem, size = 0x4, offset = 0x4, fixed_abs, tag = 'smem constant byte address 0x4 - core index']
  #allocation1 [shape = 'u32[144,128]{1,0:T(1,128)}', space=vmem, size = 0x12000, scoped, tag = 'internal scratch']
  %s0 = inlined_call_operand.hbm [shape: f32[16,128], index: 0, kind: input, shape index: {}]
  %s1 = inlined_call_operand.hbm [shape: f32[16,64], index: 1, kind: input, shape index: {}]
  %s2 = inlined_call_operand.hbm [shape: f32[64,128], index: 2, kind: input, shape index: {}]
  %s3 = inlined_call_operand.hbm [shape: f32[64,128], index: 3, kind: input, shape index: {}]
  %s4 = inlined_call_operand.vmem [shape: f32[1,128], index: 4, kind: input, shape index: {}]
  %s5 = inlined_call_operand.vmem [shape: f32[1,128], index: 5, kind: input, shape index: {}]
  %s6 = inlined_call_operand.hbm [shape: f32[16,128], index: 6, kind: output, shape index: {}]
  %s7 = sld [smem:[#allocation0]]
  $region73: #{_adanorm_call.1} parent=0
    _
  %s9 = ssub.s32 1, %s7
  %s10 = scalar_select 0, %s9, %s7
  $region1: #{_adanorm_call.1} parent=0
    #allocation2 [shape = 'u8[8192]{0}', space=vmem, size = 0x2000, scoped, tag = 'input window, operand 0']
    #allocation3 [shape = 's32[2]{0}', space=sflag, size = 0x8, scoped, tag = 'scoped memory for _adanorm_call.1']
    #allocation4 [shape = 's32[2]{0}', space=sflag, size = 0x8, scoped, tag = 'scoped memory for _adanorm_call.1']
    #allocation5 [shape = 'u8[8192]{0}', space=vmem, size = 0x2000, scoped, tag = 'input window, operand 1']
    #allocation6 [shape = 's32[2]{0}', space=sflag, size = 0x8, scoped, tag = 'scoped memory for _adanorm_call.1']
    #allocation7 [shape = 'u8[32768]{0}', space=vmem, size = 0x8000, scoped, tag = 'input window, operand 2, single buffered']
    #allocation8 [shape = 'u8[32768]{0}', space=vmem, size = 0x8000, scoped, tag = 'input window, operand 3, single buffered']
    #allocation9 [shape = 's32[1]{0}', space=sflag, size = 0x4, scoped, tag = 'scoped memory for _adanorm_call.1']
    #allocation10 [shape = 'u8[8192]{0}', space=vmem, size = 0x2000, scoped, tag = 'output window, operand 0']
    %11 = vsyncpa [#allocation3], 0
    %s12 = scalar_lea.sflag [#allocation3], 1
    %13 = vsyncpa %s12, 0
    %14 = vsyncpa [#allocation6], 0
    %s15 = scalar_lea.sflag [#allocation6], 1
    %16 = vsyncpa %s15, 0
    %17 = vsyncpa [#allocation9], 0
    %18 = vsyncpa [#allocation4], 0
    %s19 = scalar_lea.sflag [#allocation4], 1
    %20 = vsyncpa %s19, 0
    loop: start=0, step=1, limit=4
    $region2: #{_adanorm_call.1} parent=1 // loop_pre_header
      _
    $region3: #{_adanorm_call.1} parent=1 // loop_header
      %s22 = sphi 0, %s26
      %p23 = scmp.ge.s32.totalorder %s22, 4
      %s32 = sphi 0, %s34
      %s35 = sphi 0, %s32
      %s36 = sphi 0, %s35
      %s52 = sphi 0, %s36
      %s58 = sphi 0, %s60
      %s61 = sphi 0, %s58
      %s62 = sphi 0, %s61
      %s78 = sphi 0, %s62
      %s82 = sphi 0, %s82
      %s84 = sphi 0, %s82
      %s85 = sphi 0, %s84
      %s99 = sphi 0, %s85
      %s103 = sphi 0, %s103
      %s105 = sphi 0, %s103
      %s106 = sphi 0, %s105
      %s120 = sphi 0, %s106
      %s124 = sphi 0, %s124
      %s126 = sphi 0, %s124
      %s127 = sphi 0, %s126
      %s141 = sphi 0, %s127
      %s145 = sphi 0, %s145
      %s147 = sphi 0, %s145
      %s148 = sphi 0, %s147
      %s162 = sphi 0, %s148
      %s168 = sphi 0, %s170
      %s171 = sphi 0, %s168
      %s172 = sphi 0, %s171
      %s188 = sphi 0, %s172
    $region4: #{_adanorm_call.1} parent=1 // loop_header_branch
      %25 = sbr.rel (%p23) target = $region8
    $region5: #{_adanorm_call.1} parent=1 // loop_body
      %s27 = ssub.s32 %s22, 1
      %s28 = ssub.s32 %s22, 2
      %s29 = sadd.s32 %s22, 1
      %s30 = ssub.s32 %s22, %s29
      %p31 = scmp.eq.s32.totalorder %s30, 0
      %s33 = sadd.s32 %s32, 1
      %s34 = scalar_select %p31, %s32, %s33
      %p37 = pneg %p31
      %p38 = scmp.eq.s32.totalorder %s22, 1
      %p39 = por %p37, %p38
      %p40 = scmp.ne.s32.totalorder %s32, %s35
      %p41 = scmp.eq.s32.totalorder %s22, 0
      %p42 = por %p40, %p41
      %p43 = scmp.ne.s32.totalorder %s32, %s35
      %p44 = scmp.eq.s32.totalorder %s27, 1
      %p45 = por %p43, %p44
      %p46 = scmp.ne.s32.totalorder %s35, %s36
      %p47 = scmp.eq.s32.totalorder %s27, 0
      %p48 = por %p46, %p47
      %p49 = scmp.ne.s32.totalorder %s35, %s36
      %p50 = scmp.eq.s32.totalorder %s28, 1
      %p51 = por %p49, %p50
      %p53 = scmp.ne.s32.totalorder %s36, %s52
      %p54 = scmp.eq.s32.totalorder %s28, 0
      %p55 = por %p53, %p54
      %s56 = ssub.s32 %s22, %s29
      %p57 = scmp.eq.s32.totalorder %s56, 0
      %s59 = sadd.s32 %s58, 1
      %s60 = scalar_select %p57, %s58, %s59
      %p63 = pneg %p57
      %p64 = scmp.eq.s32.totalorder %s22, 1
      %p65 = por %p63, %p64
      %p66 = scmp.ne.s32.totalorder %s58, %s61
      %p67 = scmp.eq.s32.totalorder %s22, 0
      %p68 = por %p66, %p67
      %p69 = scmp.ne.s32.totalorder %s58, %s61
      %p70 = scmp.eq.s32.totalorder %s27, 1
      %p71 = por %p69, %p70
      %p72 = scmp.ne.s32.totalorder %s61, %s62
      %p73 = scmp.eq.s32.totalorder %s27, 0
      %p74 = por %p72, %p73
      %p75 = scmp.ne.s32.totalorder %s61, %s62
      %p76 = scmp.eq.s32.totalorder %s28, 1
      %p77 = por %p75, %p76
      %p79 = scmp.ne.s32.totalorder %s62, %s78
      %p80 = scmp.eq.s32.totalorder %s28, 0
      %p81 = por %p79, %p80
      %s83 = sadd.s32 %s82, 1
      %p86 = scmp.eq.s32.totalorder %s22, 1
      %p87 = scmp.ne.s32.totalorder %s82, %s84
      %p88 = scmp.eq.s32.totalorder %s22, 0
      %p89 = por %p87, %p88
      %p90 = scmp.ne.s32.totalorder %s82, %s84
      %p91 = scmp.eq.s32.totalorder %s27, 1
      %p92 = por %p90, %p91
      %p93 = scmp.ne.s32.totalorder %s84, %s85
      %p94 = scmp.eq.s32.totalorder %s27, 0
      %p95 = por %p93, %p94
      %p96 = scmp.ne.s32.totalorder %s84, %s85
      %p97 = scmp.eq.s32.totalorder %s28, 1
      %p98 = por %p96, %p97
      %p100 = scmp.ne.s32.totalorder %s85, %s99
      %p101 = scmp.eq.s32.totalorder %s28, 0
      %p102 = por %p100, %p101
      %s104 = sadd.s32 %s103, 1
      %p107 = scmp.eq.s32.totalorder %s22, 1
      %p108 = scmp.ne.s32.totalorder %s103, %s105
      %p109 = scmp.eq.s32.totalorder %s22, 0
      %p110 = por %p108, %p109
      %p111 = scmp.ne.s32.totalorder %s103, %s105
      %p112 = scmp.eq.s32.totalorder %s27, 1
      %p113 = por %p111, %p112
      %p114 = scmp.ne.s32.totalorder %s105, %s106
      %p115 = scmp.eq.s32.totalorder %s27, 0
      %p116 = por %p114, %p115
      %p117 = scmp.ne.s32.totalorder %s105, %s106
      %p118 = scmp.eq.s32.totalorder %s28, 1
      %p119 = por %p117, %p118
      %p121 = scmp.ne.s32.totalorder %s106, %s120
      %p122 = scmp.eq.s32.totalorder %s28, 0
      %p123 = por %p121, %p122
      %s125 = sadd.s32 %s124, 1
      %p128 = scmp.eq.s32.totalorder %s22, 1
      %p129 = scmp.ne.s32.totalorder %s124, %s126
      %p130 = scmp.eq.s32.totalorder %s22, 0
      %p131 = por %p129, %p130
      %p132 = scmp.ne.s32.totalorder %s124, %s126
      %p133 = scmp.eq.s32.totalorder %s27, 1
      %p134 = por %p132, %p133
      %p135 = scmp.ne.s32.totalorder %s126, %s127
      %p136 = scmp.eq.s32.totalorder %s27, 0
      %p137 = por %p135, %p136
      %p138 = scmp.ne.s32.totalorder %s126, %s127
      %p139 = scmp.eq.s32.totalorder %s28, 1
      %p140 = por %p138, %p139
      %p142 = scmp.ne.s32.totalorder %s127, %s141
      %p143 = scmp.eq.s32.totalorder %s28, 0
      %p144 = por %p142, %p143
      %s146 = sadd.s32 %s145, 1
      %p149 = scmp.eq.s32.totalorder %s22, 1
      %p150 = scmp.ne.s32.totalorder %s145, %s147
      %p151 = scmp.eq.s32.totalorder %s22, 0
      %p152 = por %p150, %p151
      %p153 = scmp.ne.s32.totalorder %s145, %s147
      %p154 = scmp.eq.s32.totalorder %s27, 1
      %p155 = por %p153, %p154
      %p156 = scmp.ne.s32.totalorder %s147, %s148
      %p157 = scmp.eq.s32.totalorder %s27, 0
      %p158 = por %p156, %p157
      %p159 = scmp.ne.s32.totalorder %s147, %s148
      %p160 = scmp.eq.s32.totalorder %s28, 1
      %p161 = por %p159, %p160
      %p163 = scmp.ne.s32.totalorder %s148, %s162
      %p164 = scmp.eq.s32.totalorder %s28, 0
      %p165 = por %p163, %p164
      %s166 = ssub.s32 %s22, %s29
      %p167 = scmp.eq.s32.totalorder %s166, 0
      %s169 = sadd.s32 %s168, 1
      %s170 = scalar_select %p167, %s168, %s169
      %p173 = pneg %p167
      %p174 = scmp.eq.s32.totalorder %s22, 1
      %p175 = por %p173, %p174
      %p176 = scmp.ne.s32.totalorder %s168, %s171
      %p177 = scmp.eq.s32.totalorder %s22, 0
      %p178 = por %p176, %p177
      %p179 = scmp.ne.s32.totalorder %s168, %s171
      %p180 = scmp.eq.s32.totalorder %s27, 1
      %p181 = por %p179, %p180
      %p182 = scmp.ne.s32.totalorder %s171, %s172
      %p183 = scmp.eq.s32.totalorder %s27, 0
      %p184 = por %p182, %p183
      %p185 = scmp.ne.s32.totalorder %s171, %s172
      %p186 = scmp.eq.s32.totalorder %s28, 1
      %p187 = por %p185, %p186
      %p189 = scmp.ne.s32.totalorder %s172, %s188
      %p190 = scmp.eq.s32.totalorder %s28, 0
      %p191 = por %p189, %p190
      %p192 = scmp.le.s32.totalorder 1, %s22
      %p193 = scmp.lt.s32.totalorder %s22, 3
      %p194 = pnand %p192, %p193
      %p195 = pneg %p194
      // Predicated region
      $region9: #{_adanorm_call.1} parent=5 // pred_check
        _
      $region10: #{_adanorm_call.1} parent=5 // pred_check_branch
        %197 = sbr.rel (%p194) target = $region12
      $region11: #{_adanorm_call.1} parent=5 // pred_region
        %s198 = ssub.s32 %s22, 1
        // Predicated region
        $region13: #{_adanorm_call.1} parent=11 // pred_check
          %p199 = pneg %p95
        $region14: #{_adanorm_call.1} parent=11 // pred_check_branch
          %201 = sbr.rel (%p199) target = $region16
        $region15: #{_adanorm_call.1} parent=11 // pred_region
          %s203 = ssub.s32 1024, 1024
          %204 = vsyncadd [#allocation6], %s203
          %s205 = sshll.u32 [#allocation7], 4
          %s206 = int_to_ptr.vmem [resolvable:$true] %s205
          %211 = dma.hbm_to_vmem [thread:$0]  %s2, 1024, %s206, [#allocation6], 128, 128, 8
        $region16: #{_adanorm_call.1} parent=11 // pred_fallthru
          _
        // Predicated region
        $region17: #{_adanorm_call.1} parent=11 // pred_check
          %p212 = pneg %p116
        $region18: #{_adanorm_call.1} parent=11 // pred_check_branch
          %214 = sbr.rel (%p212) target = $region20
        $region19: #{_adanorm_call.1} parent=11 // pred_region
          %s216 = ssub.s32 1024, 1024
          %217 = vsyncadd [#allocation9], %s216
          %s218 = sshll.u32 [#allocation8], 4
          %s219 = int_to_ptr.vmem [resolvable:$true] %s218
          %224 = dma.hbm_to_vmem [thread:$0]  %s3, 1024, %s219, [#allocation9], 128, 128, 8
        $region20: #{_adanorm_call.1} parent=11 // pred_fallthru
          _
        // Predicated region
        $region21: #{_adanorm_call.1} parent=11 // pred_check
          %p225 = pneg %p137
        $region22: #{_adanorm_call.1} parent=11 // pred_check_branch
          %227 = sbr.rel (%p225) target = $region24
        $region23: #{_adanorm_call.1} parent=11 // pred_region
          _
        $region24: #{_adanorm_call.1} parent=11 // pred_fallthru
          _
        // Predicated region
        $region25: #{_adanorm_call.1} parent=11 // pred_check
          %p228 = pneg %p158
        $region26: #{_adanorm_call.1} parent=11 // pred_check_branch
          %230 = sbr.rel (%p228) target = $region28
        $region27: #{_adanorm_call.1} parent=11 // pred_region
          _
        $region28: #{_adanorm_call.1} parent=11 // pred_fallthru
          _
      $region12: #{_adanorm_call.1} parent=5 // pred_fallthru
        _
      %p231 = scmp.lt.s32.totalorder %s22, 2
      // Predicated region
      $region29: #{_adanorm_call.1} parent=5 // pred_check
        %p232 = pneg %p231
      $region30: #{_adanorm_call.1} parent=5 // pred_check_branch
        %234 = sbr.rel (%p232) target = $region32
      $region31: #{_adanorm_call.1} parent=5 // pred_region
        // Predicated region
        $region33: #{_adanorm_call.1} parent=31 // pred_check
          %p235 = pneg %p42
        $region34: #{_adanorm_call.1} parent=31 // pred_check_branch
          %237 = sbr.rel (%p235) target = $region36
        $region35: #{_adanorm_call.1} parent=31 // pred_region
          %s238 = sand.u32 %s32, 1
          %s239 = scalar_lea.sflag [#allocation3], %s238
          %s240 = sand.u32 %s32, 1
          %s241 = smul.addr %s240, 8
          %s242 = scalar_lea.vmem [#allocation2], %s241
          %s244 = ssub.s32 128, 128
          %245 = vsyncadd %s239, %s244
          %s246 = smul.addr %s22, 128
          %s247 = scalar_lea.hbm %s0, %s246
          %s249 = sshll.u32 %s242, 4
          %s250 = int_to_ptr.vmem [resolvable:$true] %s249
          %252 = dma.hbm_to_vmem [thread:$0]  %s247, 128, %s250, %s239
        $region36: #{_adanorm_call.1} parent=31 // pred_fallthru
          _
        // Predicated region
        $region37: #{_adanorm_call.1} parent=31 // pred_check
          %p253 = pneg %p68
        $region38: #{_adanorm_call.1} parent=31 // pred_check_branch
          %255 = sbr.rel (%p253) target = $region40
        $region39: #{_adanorm_call.1} parent=31 // pred_region
          %s256 = sand.u32 %s22, 1
          %s257 = scalar_lea.sflag [#allocation6], %s256
          %s258 = sand.u32 %s58, 1
          %s259 = smul.addr %s258, 8
          %s260 = scalar_lea.vmem [#allocation5], %s259
          %s262 = ssub.s32 128, 128
          %263 = vsyncadd %s257, %s262
          %s264 = smul.addr %s22, 128
          %s265 = scalar_lea.hbm %s1, %s264
          %s267 = sshll.u32 %s260, 4
          %s268 = int_to_ptr.vmem [resolvable:$true] %s267
          %270 = dma.hbm_to_vmem [thread:$0]  %s265, 128, %s268, %s257
        $region40: #{_adanorm_call.1} parent=31 // pred_fallthru
          _
      $region32: #{_adanorm_call.1} parent=5 // pred_fallthru
        _
      %p271 = scmp.le.s32.totalorder 1, %s22
      %p272 = scmp.lt.s32.totalorder %s22, 3
      %p273 = pnand %p271, %p272
      %p274 = pneg %p273
      // Predicated region
      $region41: #{_adanorm_call.1} parent=5 // pred_check
        _
      $region42: #{_adanorm_call.1} parent=5 // pred_check_branch
        %276 = sbr.rel (%p273) target = $region44
      $region43: #{_adanorm_call.1} parent=5 // pred_region
        %s277 = ssub.s32 %s22, 1
        %s278 = sand.u32 %s35, 1
        %s279 = scalar_lea.sflag [#allocation3], %s278
        %s280 = sand.u32 %s35, 1
        %s281 = smul.addr %s280, 8
        %s282 = scalar_lea.vmem [#allocation2], %s281
        // Predicated region
        $region45: #{_adanorm_call.1} parent=43 // pred_check
          %p283 = pneg %p48
        $region46: #{_adanorm_call.1} parent=43 // pred_check_branch
          %285 = sbr.rel (%p283) target = $region48
        $region47: #{_adanorm_call.1} parent=43 // pred_region
          %286 = dma.done %s279, 128
        $region48: #{_adanorm_call.1} parent=43 // pred_fallthru
          _
        %s287 = sand.u32 %s27, 1
        %s288 = scalar_lea.sflag [#allocation6], %s287
        %s289 = sand.u32 %s61, 1
        %s290 = smul.addr %s289, 8
        %s291 = scalar_lea.vmem [#allocation5], %s290
        // Predicated region
        $region49: #{_adanorm_call.1} parent=43 // pred_check
          %p292 = pneg %p74
        $region50: #{_adanorm_call.1} parent=43 // pred_check_branch
          %294 = sbr.rel (%p292) target = $region52
        $region51: #{_adanorm_call.1} parent=43 // pred_region
          %295 = dma.done %s288, 128
        $region52: #{_adanorm_call.1} parent=43 // pred_fallthru
          _
        // Predicated region
        $region53: #{_adanorm_call.1} parent=43 // pred_check
          %p296 = pneg %p95
        $region54: #{_adanorm_call.1} parent=43 // pred_check_branch
          %298 = sbr.rel (%p296) target = $region56
        $region55: #{_adanorm_call.1} parent=43 // pred_region
          %299 = dma.done [#allocation6], 1024
        $region56: #{_adanorm_call.1} parent=43 // pred_fallthru
          _
        // Predicated region
        $region57: #{_adanorm_call.1} parent=43 // pred_check
          %p300 = pneg %p116
        $region58: #{_adanorm_call.1} parent=43 // pred_check_branch
          %302 = sbr.rel (%p300) target = $region60
        $region59: #{_adanorm_call.1} parent=43 // pred_region
          %303 = dma.done [#allocation9], 1024
        $region60: #{_adanorm_call.1} parent=43 // pred_fallthru
          _
        %s304 = sand.u32 %s35, 1
        %s305 = scalar_lea.sflag [#allocation3], %s304
        %s306 = sand.u32 %s35, 1
        %s307 = smul.addr %s306, 8
        %s308 = scalar_lea.vmem [#allocation2], %s307
        %p309 = pneg %p48
        %p310 = pneg %p45
        %s311 = sand.u32 %s27, 1
        %s312 = scalar_lea.sflag [#allocation6], %s311
        %s313 = sand.u32 %s61, 1
        %s314 = smul.addr %s313, 8
        %s315 = scalar_lea.vmem [#allocation5], %s314
        %p316 = pneg %p74
        %p317 = pneg %p71
        %p318 = pneg %p95
        %p319 = pneg %p92
        %p320 = pneg %p116
        %p321 = pneg %p113
        %p322 = pneg %p137
        %p323 = pneg %p134
        %p324 = pneg %p158
        %p325 = pneg %p155
        %p326 = pneg %p184
        %p327 = pneg %p181
        %s328 = sand.u32 %s171, 1
        %s329 = scalar_lea.sflag [#allocation4], %s328
        %s330 = sand.u32 %s171, 1
        %s331 = smul.addr %s330, 8
        %s332 = scalar_lea.vmem [#allocation10], %s331
        %v333 = vld [vmem:[%s282] sm:$0xff]
        %334 = vadd.xlane.f32.xlu0 %v333
        %v335 = vpop.xlane.xlu0 %334
        %v336 = vrcp.pop 128.0
        %v337 = vmul.f32 %v335, %v336
        %v338 = vsub.f32 %v333, %v337
        %v339 = vmul.f32 %v338, %v338
        %340 = vadd.xlane.f32.xlu0 %v339
        %v341 = vpop.xlane.xlu0 %340
        %v342 = vmul.f32 %v341, %v336
        %v343 = vadd.f32 %v342, 1e-05
        %v344 = vrsqrt.pop %v343
        %v345 = vmul.f32 %v338, %v344
        %v346 = vld [vmem:[%s291] sm:$0xff]
        %v347 = vld [vmem:[#allocation7] sm:$0xff]
        %v348 = vld [vmem:[#allocation7 + $0x8] sm:$0xff]
        %v349 = vld [vmem:[#allocation7 + $0x10] sm:$0xff]
        %v350 = vld [vmem:[#allocation7 + $0x18] sm:$0xff]
        %v351 = vld [vmem:[#allocation7 + $0x20] sm:$0xff]
        %v352 = vld [vmem:[#allocation7 + $0x28] sm:$0xff]
        %v353 = vld [vmem:[#allocation7 + $0x30] sm:$0xff]
        %v354 = vld [vmem:[#allocation7 + $0x38] sm:$0xff]
        %v355 = vld [vmem:[%s4] sm:$0x1]
        %v357 = vlaneseq
        %v358 = vshrl.u32 %v357, 7
        %v359 = vsub.s32 0, %v358
        %v360 = vrot.slane %v355, %v359
        %vm362 = vcmask 523264
        %v364 = vsel %vm362, %v346, 0
        %366 = vmatprep.subr.mxu0 0.0
        %367 = vmatpush1.msra.mxu0 0.0
        %368 = vmatprep.subr.mxu0 0.0
        %369 = vmatpush1.msra.mxu0 0.0
        %370 = vmatprep.subr.mxu0 0.0
        %371 = vmatpush1.msra.mxu0 0.0
        %372 = vmatprep.subr.mxu0 0.0
        %373 = vmatpush1.msra.mxu0 0.0
        %374 = vmatprep.subr.mxu0 0.0
        %375 = vmatpush1.msra.mxu0 0.0
        %376 = vmatprep.subr.mxu0 0.0
        %377 = vmatpush1.msra.mxu0 0.0
        %378 = vmatprep.subr.mxu0 0.0
        %379 = vmatpush1.msra.mxu0 0.0
        %380 = vmatprep.subr.mxu0 0.0
        %381 = vmatpush1.msra.mxu0 0.0
        %382 = vmatprep.subr.mxu0 0.0
        %383 = vmatpush1.msra.mxu0 %v354
        %384 = vmatprep.subr.mxu0 0.0
        %385 = vmatpush1.msra.mxu0 %v353
        %386 = vmatprep.subr.mxu0 0.0
        %387 = vmatpush1.msra.mxu0 %v352
        %388 = vmatprep.subr.mxu0 0.0
        %389 = vmatpush1.msra.mxu0 %v351
        %390 = vmatprep.subr.mxu0 0.0
        %391 = vmatpush1.msra.mxu0 %v350
        %392 = vmatprep.subr.mxu0 0.0
        %393 = vmatpush1.msra.mxu0 %v349
        %394 = vmatprep.subr.mxu0 0.0
        %395 = vmatpush1.msra.mxu0 %v348
        %396 = vmatprep.subr.mxu0 0.0
        %397 = vmatpush1.msra.mxu0 %v347
        %398 = vmatprep.subr.mxu0 0.0
        %399 = vmatpush2.msra.mxu0 0.0
        %400 = vmatprep.subr.mxu0 0.0
        %401 = vmatpush2.msra.mxu0 0.0
        %402 = vmatprep.subr.mxu0 0.0
        %403 = vmatpush2.msra.mxu0 0.0
        %404 = vmatprep.subr.mxu0 0.0
        %405 = vmatpush2.msra.mxu0 0.0
        %406 = vmatprep.subr.mxu0 0.0
        %407 = vmatpush2.msra.mxu0 0.0
        %408 = vmatprep.subr.mxu0 0.0
        %409 = vmatpush2.msra.mxu0 0.0
        %410 = vmatprep.subr.mxu0 0.0
        %411 = vmatpush2.msra.mxu0 0.0
        %412 = vmatprep.subr.mxu0 0.0
        %413 = vmatpush2.msra.mxu0 0.0
        %414 = vmatprep.subr.mxu0 0.0
        %415 = vmatpush2.msra.mxu0 0.0
        %416 = vmatprep.subr.mxu0 0.0
        %417 = vmatpush2.msra.mxu0 0.0
        %418 = vmatprep.subr.mxu0 0.0
        %419 = vmatpush2.msra.mxu0 0.0
        %420 = vmatprep.subr.mxu0 0.0
        %421 = vmatpush2.msra.mxu0 0.0
        %422 = vmatprep.subr.mxu0 0.0
        %423 = vmatpush2.msra.mxu0 0.0
        %424 = vmatprep.subr.mxu0 0.0
        %425 = vmatpush2.msra.mxu0 0.0
        %426 = vmatprep.subr.mxu0 0.0
        %427 = vmatpush2.msra.mxu0 0.0
        %428 = vmatprep.subr.mxu0 0.0
        %429 = vmatpush2.msra.mxu0 0.0
        %430 = vmatprep.mubr.f32.mxu0 0.0
        %431 = vmatmul.mubr.f32.gmra.mxu0 %v364
        %v432 = vpop.f32.mrf.mxu0
        %v433 = vadd.f32 %v360, %v432
        %v434 = vpop.f32.mrf.mxu0
        %435 = vdwg.mxu0
        %v436 = vld [vmem:[#allocation8] sm:$0xff]
        %v437 = vld [vmem:[#allocation8 + $0x8] sm:$0xff]
        %v438 = vld [vmem:[#allocation8 + $0x10] sm:$0xff]
        %v439 = vld [vmem:[#allocation8 + $0x18] sm:$0xff]
        %v440 = vld [vmem:[#allocation8 + $0x20] sm:$0xff]
        %v441 = vld [vmem:[#allocation8 + $0x28] sm:$0xff]
        %v442 = vld [vmem:[#allocation8 + $0x30] sm:$0xff]
        %v443 = vld [vmem:[#allocation8 + $0x38] sm:$0xff]
        %v444 = vld [vmem:[%s5] sm:$0x1]
        %v446 = vlaneseq
        %v447 = vshrl.u32 %v446, 7
        %v448 = vsub.s32 0, %v447
        %v449 = vrot.slane %v444, %v448
        %451 = vmatprep.subr.mxu0 0.0
        %452 = vmatpush1.msra.mxu0 0.0
        %453 = vmatprep.subr.mxu0 0.0
        %454 = vmatpush1.msra.mxu0 0.0
        %455 = vmatprep.subr.mxu0 0.0
        %456 = vmatpush1.msra.mxu0 0.0
        %457 = vmatprep.subr.mxu0 0.0
        %458 = vmatpush1.msra.mxu0 0.0
        %459 = vmatprep.subr.mxu0 0.0
        %460 = vmatpush1.msra.mxu0 0.0
        %461 = vmatprep.subr.mxu0 0.0
        %462 = vmatpush1.msra.mxu0 0.0
        %463 = vmatprep.subr.mxu0 0.0
        %464 = vmatpush1.msra.mxu0 0.0
        %465 = vmatprep.subr.mxu0 0.0
        %466 = vmatpush1.msra.mxu0 0.0
        %467 = vmatprep.subr.mxu0 0.0
        %468 = vmatpush1.msra.mxu0 %v443
        %469 = vmatprep.subr.mxu0 0.0
        %470 = vmatpush1.msra.mxu0 %v442
        %471 = vmatprep.subr.mxu0 0.0
        %472 = vmatpush1.msra.mxu0 %v441
        %473 = vmatprep.subr.mxu0 0.0
        %474 = vmatpush1.msra.mxu0 %v440
        %475 = vmatprep.subr.mxu0 0.0
        %476 = vmatpush1.msra.mxu0 %v439
        %477 = vmatprep.subr.mxu0 0.0
        %478 = vmatpush1.msra.mxu0 %v438
        %479 = vmatprep.subr.mxu0 0.0
        %480 = vmatpush1.msra.mxu0 %v437
        %481 = vmatprep.subr.mxu0 0.0
        %482 = vmatpush1.msra.mxu0 %v436
        %483 = vmatprep.subr.mxu0 0.0
        %484 = vmatpush2.msra.mxu0 0.0
        %485 = vmatprep.subr.mxu0 0.0
        %486 = vmatpush2.msra.mxu0 0.0
        %487 = vmatprep.subr.mxu0 0.0
        %488 = vmatpush2.msra.mxu0 0.0
        %489 = vmatprep.subr.mxu0 0.0
        %490 = vmatpush2.msra.mxu0 0.0
        %491 = vmatprep.subr.mxu0 0.0
        %492 = vmatpush2.msra.mxu0 0.0
        %493 = vmatprep.subr.mxu0 0.0
        %494 = vmatpush2.msra.mxu0 0.0
        %495 = vmatprep.subr.mxu0 0.0
        %496 = vmatpush2.msra.mxu0 0.0
        %497 = vmatprep.subr.mxu0 0.0
        %498 = vmatpush2.msra.mxu0 0.0
        %499 = vmatprep.subr.mxu0 0.0
        %500 = vmatpush2.msra.mxu0 0.0
        %501 = vmatprep.subr.mxu0 0.0
        %502 = vmatpush2.msra.mxu0 0.0
        %503 = vmatprep.subr.mxu0 0.0
        %504 = vmatpush2.msra.mxu0 0.0
        %505 = vmatprep.subr.mxu0 0.0
        %506 = vmatpush2.msra.mxu0 0.0
        %507 = vmatprep.subr.mxu0 0.0
        %508 = vmatpush2.msra.mxu0 0.0
        %509 = vmatprep.subr.mxu0 0.0
        %510 = vmatpush2.msra.mxu0 0.0
        %511 = vmatprep.subr.mxu0 0.0
        %512 = vmatpush2.msra.mxu0 0.0
        %513 = vmatprep.subr.mxu0 0.0
        %514 = vmatpush2.msra.mxu0 0.0
        %515 = vmatprep.mubr.f32.mxu0 0.0
        %516 = vmatmul.mubr.f32.gmra.mxu0 %v364
        %v517 = vpop.f32.mrf.mxu0
        %v518 = vadd.f32 %v449, %v517
        %v519 = vpop.f32.mrf.mxu0
        %520 = vdwg.mxu0
        %v521 = vmul.f32 %v345, %v433
        %v522 = vadd.f32 %v521, %v518
        %523 = vst [vmem:[%s332] sm:$0xff] %v522
        %s524 = sand.u32 %s171, 1
        %s525 = scalar_lea.sflag [#allocation4], %s524
        %s526 = sand.u32 %s171, 1
        %s527 = smul.addr %s526, 8
        %s528 = scalar_lea.vmem [#allocation10], %s527
        // Predicated region
        $region61: #{_adanorm_call.1} parent=43 // pred_check
          %p529 = pneg %p181
        $region62: #{_adanorm_call.1} parent=43 // pred_check_branch
          %531 = sbr.rel (%p529) target = $region64
        $region63: #{_adanorm_call.1} parent=43 // pred_region
          %s533 = ssub.s32 128, 128
          %534 = vsyncadd %s525, %s533
          %s535 = smul.addr %s27, 128
          %s536 = scalar_lea.hbm %s6, %s535
          %s538 = sshll.u32 %s528, 4
          %s539 = int_to_ptr.vmem [resolvable:$true] %s538
          %541 = dma.vmem_to_hbm [thread:$0]  %s539, 128, %s536, %s525
        $region64: #{_adanorm_call.1} parent=43 // pred_fallthru
          _
      $region44: #{_adanorm_call.1} parent=5 // pred_fallthru
        _
      %p542 = scmp.le.s32.totalorder 2, %s22
      // Predicated region
      $region65: #{_adanorm_call.1} parent=5 // pred_check
        %p543 = pneg %p542
      $region66: #{_adanorm_call.1} parent=5 // pred_check_branch
        %545 = sbr.rel (%p543) target = $region68
      $region67: #{_adanorm_call.1} parent=5 // pred_region
        %s546 = ssub.s32 %s22, 2
        // Predicated region
        $region69: #{_adanorm_call.1} parent=67 // pred_check
          %p547 = pneg %p187
        $region70: #{_adanorm_call.1} parent=67 // pred_check_branch
          %549 = sbr.rel (%p547) target = $region72
        $region71: #{_adanorm_call.1} parent=67 // pred_region
          %s550 = sand.u32 %s172, 1
          %s551 = scalar_lea.sflag [#allocation4], %s550
          %s552 = sand.u32 %s172, 1
          %s553 = smul.addr %s552, 8
          %s554 = scalar_lea.vmem [#allocation10], %s553
          %555 = dma.done %s551, 128
        $region72: #{_adanorm_call.1} parent=67 // pred_fallthru
          _
      $region68: #{_adanorm_call.1} parent=5 // pred_fallthru
        _
    $region6: #{_adanorm_call.1} parent=1 // loop_footer
      %s26 = sadd.s32 1, %s22
    $region7: #{_adanorm_call.1} parent=1 // loop_footer_branch
      %21 = sbr.rel target = $region3
    $region8: #{_adanorm_call.1} parent=1 // loop_exit
      _
    %556 = vsyncpa [#allocation3], 1
    %s557 = scalar_lea.sflag [#allocation3], 1
    %558 = vsyncpa %s557, 1
    %559 = vsyncpa [#allocation6], 1
    %s560 = scalar_lea.sflag [#allocation6], 1
    %561 = vsyncpa %s560, 1
    %562 = vsyncpa [#allocation9], 1
    %563 = vsyncpa [#allocation4], 1
    %s564 = scalar_lea.sflag [#allocation4], 1
    %565 = vsyncpa %s564, 1

</llo_original>
